<compile_context>
chip_gen: v6e
topology: v6e:2x2x1
jax: 0.10.0
libtpu: 0.0.40
codegen_flags: <defaults>
</compile_context>

<pallas_src>
import jax
import jax.numpy as jnp
from jax.experimental import pallas as pl
from jax.experimental.pallas import tpu as pltpu


def _make_cross_stitch_kernel(T):
    """Builds a kernel for T tasks: kernel(p_ref, x_0..x_{T-1}, o_0..o_{T-1})."""

    def kernel(p_ref, *refs):
        # p_ref : (T, T, tc, 1)  -- per-channel mixing weights (C on sublanes)
        # x_j   : (tc, tl)       -- feature tile of input task j
        # o_i   : (tc, tl)       -- feature tile of output task i
        x_refs = refs[:T]
        o_refs = refs[T:]

        # Load each input tile exactly once.
        xs = [x_refs[j][...] for j in range(T)]

        for i in range(T):
            # Unrolled FMA chain over the (tiny) task axis; params are f32 so
            # accumulation is f32 even for bf16 features.
            acc = p_ref[i, 0] * xs[0]
            for j in range(1, T):
                acc = acc + p_ref[i, j] * xs[j]
            o_refs[i][...] = acc.astype(o_refs[i].dtype)

    return kernel


def _pick_tiles(C, L):
    # Channel (sublane) tile: multiple of 8, or the full C if it is small.
    tc = C if C <= 256 else 256
    # Lane tile: multiple of 128, or the full L if it is small.
    # TODO(synk): for workloads where H*W < 128 and C >= 128, a (B, H*W, C)
    # layout with weights as lane vectors would give fully dense stores.
    tl = L if L <= 1024 else 1024
    return tc, tl


def cross_stitch_pallas(xs, params):
    """xs: tuple of T arrays (B, C, L); params: (T, T, C) f32 -> tuple of T (B, C, L)."""
    T = len(xs)
    B, C, L = xs[0].shape
    dtype = xs[0].dtype
    tc, tl = _pick_tiles(C, L)

    # Put C on the sublane axis of the weight tile so the broadcast against the
    # (tc, tl) feature tile is along lanes only.
    p4 = params.reshape(T, T, C, 1)

    grid = (B, pl.cdiv(C, tc), pl.cdiv(L, tl))

    feat_spec = pl.BlockSpec((None, tc, tl), lambda b, ci, li: (b, ci, li))
    param_spec = pl.BlockSpec((T, T, tc, 1), lambda b, ci, li: (0, 0, ci, 0))

    out_shape = tuple(jax.ShapeDtypeStruct((B, C, L), dtype) for _ in range(T))
    out_specs = tuple(feat_spec for _ in range(T))

    outs = pl.pallas_call(
        _make_cross_stitch_kernel(T),
        out_shape=out_shape,
        grid_spec=pltpu.PrefetchScalarGridSpec(
            num_scalar_prefetch=0,
            grid=grid,
            in_specs=[param_spec] + [feat_spec] * T,
            out_specs=out_specs,
        ),
        compiler_params=pltpu.CompilerParams(
            dimension_semantics=("parallel", "parallel", "parallel"),
            vmem_limit_bytes=32 * 1024 * 1024,
        ),
    )(p4, *xs)
    return outs


class CrossStitchUnit:
    """JAX/Pallas equivalent of CrossStitch_Unit."""

    def __init__(self, tasks, num_feature, alpha, beta):
        self.tasks = list(tasks)
        T = len(self.tasks)
        # params[i, j, c]: weight applied to channel c of task j's features when
        # producing task i's output. Diagonal = alpha, off-diagonal = beta.
        eye = jnp.eye(T, dtype=jnp.float32)[:, :, None]          # (T, T, 1)
        p = alpha * eye + beta * (1.0 - eye)                     # (T, T, 1)
        self.params = jnp.broadcast_to(p, (T, T, num_feature)).astype(jnp.float32)

    def __call__(self, task_feature):
        assert list(task_feature.keys()) == self.tasks
        B, C, H, W = task_feature[self.tasks[0]].shape
        # Contiguous flatten of the spatial dims: metadata-only, no HBM copy.
        xs = tuple(task_feature[t].reshape(B, C, H * W) for t in self.tasks)
        outs = cross_stitch_pallas(xs, self.params)
        return {t: outs[i].reshape(B, C, H, W) for i, t in enumerate(self.tasks)}


def _reference(task_feature, tasks, params):
    # Pure-JAX reference mirroring the PyTorch forward.
    out = {}
    for ti, t_i in enumerate(tasks):
        acc = 0.0
        for tj, t_j in enumerate(tasks):
            w = params[ti, tj]                         # (C,)
            acc = acc + w[None, :, None, None] * task_feature[t_j]
        out[t_i] = acc
    return out


if __name__ == "__main__":
    # --- config 1: two tasks, L = 256 (lane-dense tiles) ---
    tasks = ["seg", "depth"]
    B, C, H, W = 2, 8, 16, 16
    alpha, beta = 0.9, 0.1

    key = jax.random.PRNGKey(0)
    keys = jax.random.split(key, len(tasks))
    task_feature = {
        t: jax.random.normal(k, (B, C, H, W), dtype=jnp.float32)
        for t, k in zip(tasks, keys)
    }

    unit = CrossStitchUnit(tasks, C, alpha, beta)
    out = unit(task_feature)
    jax.block_until_ready(out)

    ref = _reference(task_feature, tasks, unit.params)
    for t in tasks:
        assert out[t].shape == (B, C, H, W)
        assert jnp.allclose(out[t], ref[t], atol=1e-5, rtol=1e-5)

    # --- config 2: three tasks, small spatial map (L < 128, full-dim lane block) ---
    tasks3 = ["a", "b", "c"]
    B2, C2, H2, W2 = 2, 4, 8, 8
    keys3 = jax.random.split(jax.random.PRNGKey(1), len(tasks3))
    tf3 = {
        t: jax.random.normal(k, (B2, C2, H2, W2), dtype=jnp.float32)
        for t, k in zip(tasks3, keys3)
    }
    unit3 = CrossStitchUnit(tasks3, C2, 0.8, 0.2)
    out3 = unit3(tf3)
    jax.block_until_ready(out3)
    ref3 = _reference(tf3, tasks3, unit3.params)
    for t in tasks3:
        assert out3[t].shape == (B2, C2, H2, W2)
        assert jnp.allclose(out3[t], ref3[t], atol=1e-5, rtol=1e-5)

    print("KERNEL_OK")
</pallas_src>

<mosaic_0001>
module attributes {stable_mosaic.version = 11 : i64} {
  func.func @kernel(%arg0: i32, %arg1: i32, %arg2: i32, %arg3: memref<2x2x8x1xf32, #tpu.memory_space<vmem>>, %arg4: memref<1x8x256xf32, #tpu.memory_space<vmem>>, %arg5: memref<1x8x256xf32, #tpu.memory_space<vmem>>, %arg6: memref<1x8x256xf32, #tpu.memory_space<vmem>>, %arg7: memref<1x8x256xf32, #tpu.memory_space<vmem>>) attributes {dimension_semantics = [#tpu.dimension_semantics<parallel>, #tpu.dimension_semantics<parallel>, #tpu.dimension_semantics<parallel>], iteration_bounds = array<i64: 2, 1, 1>, scalar_prefetch = 0 : i64, scratch_operands = 0 : i64, tpu.core_type = #tpu.core_type<tc>, window_params = [{transform_indices = @transform_0, window_bounds = array<i64: 2, 2, 8, 1>}, {transform_indices = @transform_1, window_bounds = array<i64: 1, 8, 256>}, {transform_indices = @transform_2, window_bounds = array<i64: 1, 8, 256>}, {transform_indices = @transform_3, window_bounds = array<i64: 1, 8, 256>}, {transform_indices = @transform_4, window_bounds = array<i64: 1, 8, 256>}]} {
    %c0 = arith.constant 0 : index
    %c0_0 = arith.constant 0 : index
    %c0_1 = arith.constant 0 : index
    %0 = vector.load %arg4[%c0, %c0_0, %c0_1] : memref<1x8x256xf32, #tpu.memory_space<vmem>>, vector<1x8x256xf32>
    %1 = vector.shape_cast %0 : vector<1x8x256xf32> to vector<8x256xf32>
    %c0_2 = arith.constant 0 : index
    %c0_3 = arith.constant 0 : index
    %c0_4 = arith.constant 0 : index
    %2 = vector.load %arg5[%c0_2, %c0_3, %c0_4] : memref<1x8x256xf32, #tpu.memory_space<vmem>>, vector<1x8x256xf32>
    %3 = vector.shape_cast %2 : vector<1x8x256xf32> to vector<8x256xf32>
    %c0_5 = arith.constant 0 : index
    %c0_6 = arith.constant 0 : index
    %c0_7 = arith.constant 0 : index
    %c0_8 = arith.constant 0 : index
    %4 = vector.load %arg3[%c0_5, %c0_6, %c0_7, %c0_8] : memref<2x2x8x1xf32, #tpu.memory_space<vmem>>, vector<1x1x8x1xf32>
    %5 = vector.shape_cast %4 : vector<1x1x8x1xf32> to vector<8x1xf32>
    %6 = vector.broadcast %5 : vector<8x1xf32> to vector<8x256xf32>
    %7 = arith.mulf %6, %1 : vector<8x256xf32>
    %c0_9 = arith.constant 0 : index
    %c1 = arith.constant 1 : index
    %c0_10 = arith.constant 0 : index
    %c0_11 = arith.constant 0 : index
    %8 = vector.load %arg3[%c0_9, %c1, %c0_10, %c0_11] : memref<2x2x8x1xf32, #tpu.memory_space<vmem>>, vector<1x1x8x1xf32>
    %9 = vector.shape_cast %8 : vector<1x1x8x1xf32> to vector<8x1xf32>
    %10 = vector.broadcast %9 : vector<8x1xf32> to vector<8x256xf32>
    %11 = arith.mulf %10, %3 : vector<8x256xf32>
    %12 = arith.addf %7, %11 : vector<8x256xf32>
    %c0_12 = arith.constant 0 : index
    %c0_13 = arith.constant 0 : index
    %c0_14 = arith.constant 0 : index
    %13 = vector.load %arg6[%c0_12, %c0_13, %c0_14] : memref<1x8x256xf32, #tpu.memory_space<vmem>>, vector<1x8x256xf32>
    %14 = vector.shape_cast %13 : vector<1x8x256xf32> to vector<8x256xf32>
    %15 = vector.shape_cast %12 : vector<8x256xf32> to vector<1x8x256xf32>
    tpu.vector_store %arg6[%c0_12, %c0_13, %c0_14], %15 {strides = array<i32>} : memref<1x8x256xf32, #tpu.memory_space<vmem>>, vector<1x8x256xf32>,
    %c1_15 = arith.constant 1 : index
    %c0_16 = arith.constant 0 : index
    %c0_17 = arith.constant 0 : index
    %c0_18 = arith.constant 0 : index
    %16 = vector.load %arg3[%c1_15, %c0_16, %c0_17, %c0_18] : memref<2x2x8x1xf32, #tpu.memory_space<vmem>>, vector<1x1x8x1xf32>
    %17 = vector.shape_cast %16 : vector<1x1x8x1xf32> to vector<8x1xf32>
    %18 = vector.broadcast %17 : vector<8x1xf32> to vector<8x256xf32>
    %19 = arith.mulf %18, %1 : vector<8x256xf32>
    %c1_19 = arith.constant 1 : index
    %c1_20 = arith.constant 1 : index
    %c0_21 = arith.constant 0 : index
    %c0_22 = arith.constant 0 : index
    %20 = vector.load %arg3[%c1_19, %c1_20, %c0_21, %c0_22] : memref<2x2x8x1xf32, #tpu.memory_space<vmem>>, vector<1x1x8x1xf32>
    %21 = vector.shape_cast %20 : vector<1x1x8x1xf32> to vector<8x1xf32>
    %22 = vector.broadcast %21 : vector<8x1xf32> to vector<8x256xf32>
    %23 = arith.mulf %22, %3 : vector<8x256xf32>
    %24 = arith.addf %19, %23 : vector<8x256xf32>
    %c0_23 = arith.constant 0 : index
    %c0_24 = arith.constant 0 : index
    %c0_25 = arith.constant 0 : index
    %25 = vector.load %arg7[%c0_23, %c0_24, %c0_25] : memref<1x8x256xf32, #tpu.memory_space<vmem>>, vector<1x8x256xf32>
    %26 = vector.shape_cast %25 : vector<1x8x256xf32> to vector<8x256xf32>
    %27 = vector.shape_cast %24 : vector<8x256xf32> to vector<1x8x256xf32>
    tpu.vector_store %arg7[%c0_23, %c0_24, %c0_25], %27 {strides = array<i32>} : memref<1x8x256xf32, #tpu.memory_space<vmem>>, vector<1x8x256xf32>,
    return
  }
  func.func @transform_0(%arg0: i32, %arg1: i32, %arg2: i32) -> (i32, i32, i32, i32) {
    %c0_i32 = arith.constant 0 : i32
    %c0_i32_0 = arith.constant 0 : i32
    %c0_i32_1 = arith.constant 0 : i32
    %c0_i32_2 = arith.constant 0 : i32
    return %c0_i32, %c0_i32_0, %arg1, %c0_i32_1 : i32, i32, i32, i32
  }
  func.func @transform_1(%arg0: i32, %arg1: i32, %arg2: i32) -> (i32, i32, i32) {
    %c0_i32 = arith.constant 0 : i32
    return %arg0, %arg1, %arg2 : i32, i32, i32
  }
  func.func @transform_2(%arg0: i32, %arg1: i32, %arg2: i32) -> (i32, i32, i32) {
    %c0_i32 = arith.constant 0 : i32
    return %arg0, %arg1, %arg2 : i32, i32, i32
  }
  func.func @transform_3(%arg0: i32, %arg1: i32, %arg2: i32) -> (i32, i32, i32) {
    %c0_i32 = arith.constant 0 : i32
    return %arg0, %arg1, %arg2 : i32, i32, i32
  }
  func.func @transform_4(%arg0: i32, %arg1: i32, %arg2: i32) -> (i32, i32, i32) {
    %c0_i32 = arith.constant 0 : i32
    return %arg0, %arg1, %arg2 : i32, i32, i32
  }
}

</mosaic_0001>

<llo_original>
// kernel: tpu_custom_call.1
$region0: #{tpu_custom_call.1}
  #allocation0 [shape = 'u32[]', space=smem, size = 0x4, offset = 0x4, fixed_abs, tag = 'smem constant byte address 0x4 - core index']
  #allocation1 [shape = 'u32[144,128]{1,0:T(1,128)}', space=vmem, size = 0x12000, scoped, tag = 'internal scratch']
  %s0 = inlined_call_operand.vmem [shape: f32[2,2,8,1], index: 0, kind: input, shape index: {}]
  %s1 = inlined_call_operand.vmem [shape: f32[2,8,256], index: 1, kind: input, shape index: {}]
  %s2 = inlined_call_operand.hbm [shape: f32[2,8,256], index: 2, kind: input, shape index: {}]
  %s3 = inlined_call_operand.hbm [shape: f32[2,8,256], index: 3, kind: output, shape index: {0}]
  %s4 = inlined_call_operand.hbm [shape: f32[2,8,256], index: 4, kind: output, shape index: {1}]
  %5 = xla_tuple %s3, %s4
  %s6 = sld [smem:[#allocation0]]
  $region57: #{tpu_custom_call.1} parent=0
    _
  %s8 = ssub.s32 1, %s6
  %s9 = scalar_select 0, %s8, %s6
  $region1: #{tpu_custom_call.1} parent=0
    #allocation2 [shape = 'u8[16384]{0}', space=vmem, size = 0x4000, scoped, tag = 'input window, operand 2']
    #allocation3 [shape = 's32[2]{0}', space=sflag, size = 0x8, scoped, tag = 'scoped memory for tpu_custom_call.1']
    #allocation4 [shape = 's32[2]{0}', space=sflag, size = 0x8, scoped, tag = 'scoped memory for tpu_custom_call.1']
    #allocation5 [shape = 'u8[16384]{0}', space=vmem, size = 0x4000, scoped, tag = 'output window, operand 0']
    #allocation6 [shape = 'u8[16384]{0}', space=vmem, size = 0x4000, scoped, tag = 'output window, operand 1']
    #allocation7 [shape = 's32[2]{0}', space=sflag, size = 0x8, scoped, tag = 'scoped memory for tpu_custom_call.1']
    %10 = vsyncpa [#allocation3], 0
    %s11 = scalar_lea.sflag [#allocation3], 1
    %12 = vsyncpa %s11, 0
    %13 = vsyncpa [#allocation4], 0
    %s14 = scalar_lea.sflag [#allocation4], 1
    %15 = vsyncpa %s14, 0
    %16 = vsyncpa [#allocation7], 0
    %s17 = scalar_lea.sflag [#allocation7], 1
    %18 = vsyncpa %s17, 0
    loop: start=0, step=1, limit=4
    $region2: #{tpu_custom_call.1} parent=1 // loop_pre_header
      _
    $region3: #{tpu_custom_call.1} parent=1 // loop_header
      %s20 = sphi 0, %s24
      %p21 = scmp.ge.s32.totalorder %s20, 4
      %s27 = sphi 0, %s46
      %s28 = sphi 0, %s42
      %s29 = sphi 0, %s38
      %s30 = sphi 0, %s27
      %s31 = sphi 0, %s28
      %s32 = sphi 0, %s29
      %s33 = sphi 0, %s30
      %s34 = sphi 0, %s31
      %s35 = sphi 0, %s32
      %s49 = sphi 0, %s51
      %s52 = sphi 0, %s49
      %s53 = sphi 0, %s52
      %s69 = sphi 0, %s53
      %s79 = sphi 0, %s81
      %s82 = sphi 0, %s79
      %s83 = sphi 0, %s82
      %s99 = sphi 0, %s83
      %s109 = sphi 0, %s111
      %s112 = sphi 0, %s109
      %s113 = sphi 0, %s112
      %s129 = sphi 0, %s113
      %s139 = sphi 0, %s141
      %s142 = sphi 0, %s139
      %s143 = sphi 0, %s142
      %s159 = sphi 0, %s143
      %s169 = sphi 0, %s171
      %s172 = sphi 0, %s169
      %s173 = sphi 0, %s172
      %s189 = sphi 0, %s173
    $region4: #{tpu_custom_call.1} parent=1 // loop_header_branch
      %23 = sbr.rel (%p21) target = $region8
    $region5: #{tpu_custom_call.1} parent=1 // loop_body
      %s25 = ssub.s32 %s20, 1
      %s26 = ssub.s32 %s20, 2
      %s36 = sadd.s32 1, %s29
      %p37 = scmp.ge.s32.totalorder %s36, 1
      %s38 = scalar_select %p37, 0, %s36
      %s39 = sadd.s32 1, %s28
      %s40 = scalar_select %p37, %s39, %s28
      %p41 = scmp.ge.s32.totalorder %s40, 1
      %s42 = scalar_select %p41, 0, %s40
      %s43 = sadd.s32 1, %s27
      %s44 = scalar_select %p41, %s43, %s27
      %p45 = scmp.ge.s32.totalorder %s44, 2
      %s46 = scalar_select %p45, 0, %s44
      %s47 = ssub.s32 %s28, %s42
      %p48 = scmp.eq.s32.totalorder %s47, 0
      %s50 = sadd.s32 %s49, 1
      %s51 = scalar_select %p48, %s49, %s50
      %p54 = pneg %p48
      %p55 = scmp.eq.s32.totalorder %s20, 1
      %p56 = por %p54, %p55
      %p57 = scmp.ne.s32.totalorder %s49, %s52
      %p58 = scmp.eq.s32.totalorder %s20, 0
      %p59 = por %p57, %p58
      %p60 = scmp.ne.s32.totalorder %s49, %s52
      %p61 = scmp.eq.s32.totalorder %s25, 1
      %p62 = por %p60, %p61
      %p63 = scmp.ne.s32.totalorder %s52, %s53
      %p64 = scmp.eq.s32.totalorder %s25, 0
      %p65 = por %p63, %p64
      %p66 = scmp.ne.s32.totalorder %s52, %s53
      %p67 = scmp.eq.s32.totalorder %s26, 1
      %p68 = por %p66, %p67
      %p70 = scmp.ne.s32.totalorder %s53, %s69
      %p71 = scmp.eq.s32.totalorder %s26, 0
      %p72 = por %p70, %p71
      %s73 = ssub.s32 %s27, %s46
      %s74 = ssub.s32 %s28, %s42
      %s75 = sor.u32 %s73, %s74
      %s76 = ssub.s32 %s29, %s38
      %s77 = sor.u32 %s75, %s76
      %p78 = scmp.eq.s32.totalorder %s77, 0
      %s80 = sadd.s32 %s79, 1
      %s81 = scalar_select %p78, %s79, %s80
      %p84 = pneg %p78
      %p85 = scmp.eq.s32.totalorder %s20, 1
      %p86 = por %p84, %p85
      %p87 = scmp.ne.s32.totalorder %s79, %s82
      %p88 = scmp.eq.s32.totalorder %s20, 0
      %p89 = por %p87, %p88
      %p90 = scmp.ne.s32.totalorder %s79, %s82
      %p91 = scmp.eq.s32.totalorder %s25, 1
      %p92 = por %p90, %p91
      %p93 = scmp.ne.s32.totalorder %s82, %s83
      %p94 = scmp.eq.s32.totalorder %s25, 0
      %p95 = por %p93, %p94
      %p96 = scmp.ne.s32.totalorder %s82, %s83
      %p97 = scmp.eq.s32.totalorder %s26, 1
      %p98 = por %p96, %p97
      %p100 = scmp.ne.s32.totalorder %s83, %s99
      %p101 = scmp.eq.s32.totalorder %s26, 0
      %p102 = por %p100, %p101
      %s103 = ssub.s32 %s27, %s46
      %s104 = ssub.s32 %s28, %s42
      %s105 = sor.u32 %s103, %s104
      %s106 = ssub.s32 %s29, %s38
      %s107 = sor.u32 %s105, %s106
      %p108 = scmp.eq.s32.totalorder %s107, 0
      %s110 = sadd.s32 %s109, 1
      %s111 = scalar_select %p108, %s109, %s110
      %p114 = pneg %p108
      %p115 = scmp.eq.s32.totalorder %s20, 1
      %p116 = por %p114, %p115
      %p117 = scmp.ne.s32.totalorder %s109, %s112
      %p118 = scmp.eq.s32.totalorder %s20, 0
      %p119 = por %p117, %p118
      %p120 = scmp.ne.s32.totalorder %s109, %s112
      %p121 = scmp.eq.s32.totalorder %s25, 1
      %p122 = por %p120, %p121
      %p123 = scmp.ne.s32.totalorder %s112, %s113
      %p124 = scmp.eq.s32.totalorder %s25, 0
      %p125 = por %p123, %p124
      %p126 = scmp.ne.s32.totalorder %s112, %s113
      %p127 = scmp.eq.s32.totalorder %s26, 1
      %p128 = por %p126, %p127
      %p130 = scmp.ne.s32.totalorder %s113, %s129
      %p131 = scmp.eq.s32.totalorder %s26, 0
      %p132 = por %p130, %p131
      %s133 = ssub.s32 %s27, %s46
      %s134 = ssub.s32 %s28, %s42
      %s135 = sor.u32 %s133, %s134
      %s136 = ssub.s32 %s29, %s38
      %s137 = sor.u32 %s135, %s136
      %p138 = scmp.eq.s32.totalorder %s137, 0
      %s140 = sadd.s32 %s139, 1
      %s141 = scalar_select %p138, %s139, %s140
      %p144 = pneg %p138
      %p145 = scmp.eq.s32.totalorder %s20, 1
      %p146 = por %p144, %p145
      %p147 = scmp.ne.s32.totalorder %s139, %s142
      %p148 = scmp.eq.s32.totalorder %s20, 0
      %p149 = por %p147, %p148
      %p150 = scmp.ne.s32.totalorder %s139, %s142
      %p151 = scmp.eq.s32.totalorder %s25, 1
      %p152 = por %p150, %p151
      %p153 = scmp.ne.s32.totalorder %s142, %s143
      %p154 = scmp.eq.s32.totalorder %s25, 0
      %p155 = por %p153, %p154
      %p156 = scmp.ne.s32.totalorder %s142, %s143
      %p157 = scmp.eq.s32.totalorder %s26, 1
      %p158 = por %p156, %p157
      %p160 = scmp.ne.s32.totalorder %s143, %s159
      %p161 = scmp.eq.s32.totalorder %s26, 0
      %p162 = por %p160, %p161
      %s163 = ssub.s32 %s27, %s46
      %s164 = ssub.s32 %s28, %s42
      %s165 = sor.u32 %s163, %s164
      %s166 = ssub.s32 %s29, %s38
      %s167 = sor.u32 %s165, %s166
      %p168 = scmp.eq.s32.totalorder %s167, 0
      %s170 = sadd.s32 %s169, 1
      %s171 = scalar_select %p168, %s169, %s170
      %p174 = pneg %p168
      %p175 = scmp.eq.s32.totalorder %s20, 1
      %p176 = por %p174, %p175
      %p177 = scmp.ne.s32.totalorder %s169, %s172
      %p178 = scmp.eq.s32.totalorder %s20, 0
      %p179 = por %p177, %p178
      %p180 = scmp.ne.s32.totalorder %s169, %s172
      %p181 = scmp.eq.s32.totalorder %s25, 1
      %p182 = por %p180, %p181
      %p183 = scmp.ne.s32.totalorder %s172, %s173
      %p184 = scmp.eq.s32.totalorder %s25, 0
      %p185 = por %p183, %p184
      %p186 = scmp.ne.s32.totalorder %s172, %s173
      %p187 = scmp.eq.s32.totalorder %s26, 1
      %p188 = por %p186, %p187
      %p190 = scmp.ne.s32.totalorder %s173, %s189
      %p191 = scmp.eq.s32.totalorder %s26, 0
      %p192 = por %p190, %p191
      %p193 = scmp.le.s32.totalorder 1, %s20
      %p194 = scmp.lt.s32.totalorder %s20, 3
      %p195 = pnand %p193, %p194
      %p196 = pneg %p195
      // Predicated region
      $region9: #{tpu_custom_call.1} parent=5 // pred_check
        _
      $region10: #{tpu_custom_call.1} parent=5 // pred_check_branch
        %198 = sbr.rel (%p195) target = $region12
      $region11: #{tpu_custom_call.1} parent=5 // pred_region
        %s199 = ssub.s32 %s20, 1
        // Predicated region
        $region13: #{tpu_custom_call.1} parent=11 // pred_check
          %p200 = pneg %p65
        $region14: #{tpu_custom_call.1} parent=11 // pred_check_branch
          %202 = sbr.rel (%p200) target = $region16
        $region15: #{tpu_custom_call.1} parent=11 // pred_region
          %p203 = scmp.lt.s32.totalorder %s31, 0
          %s204 = scalar_select %p203, %s31, 0
          %s205 = smul.addr %s204, 8
          %s206 = scalar_lea.vmem %s0, %s205
        $region16: #{tpu_custom_call.1} parent=11 // pred_fallthru
          _
      $region12: #{tpu_custom_call.1} parent=5 // pred_fallthru
        _
      %p207 = scmp.lt.s32.totalorder %s20, 2
      // Predicated region
      $region17: #{tpu_custom_call.1} parent=5 // pred_check
        %p208 = pneg %p207
      $region18: #{tpu_custom_call.1} parent=5 // pred_check_branch
        %210 = sbr.rel (%p208) target = $region20
      $region19: #{tpu_custom_call.1} parent=5 // pred_region
        // Predicated region
        $region21: #{tpu_custom_call.1} parent=19 // pred_check
          %p211 = pneg %p89
        $region22: #{tpu_custom_call.1} parent=19 // pred_check_branch
          %213 = sbr.rel (%p211) target = $region24
        $region23: #{tpu_custom_call.1} parent=19 // pred_region
          %s214 = smul.u32 2, %s29
          %p215 = scmp.lt.s32.totalorder %s27, 1
          %s216 = scalar_select %p215, %s27, 1
          %p217 = scmp.lt.s32.totalorder %s28, 0
          %s218 = scalar_select %p217, %s28, 0
          %p219 = scmp.lt.s32.totalorder %s214, 1
          %s220 = scalar_select %p219, %s214, 1
          %s221 = smul.addr %s218, 2
          %s222 = sadd.s32 %s220, %s221
          %s223 = smul.addr %s216, 2
          %s224 = sadd.s32 %s222, %s223
          %s225 = smul.addr %s224, 8
          %s226 = scalar_lea.vmem %s1, %s225
          %s227 = smul.u32 2, %s29
        $region24: #{tpu_custom_call.1} parent=19 // pred_fallthru
          _
        // Predicated region
        $region25: #{tpu_custom_call.1} parent=19 // pred_check
          %p228 = pneg %p119
        $region26: #{tpu_custom_call.1} parent=19 // pred_check_branch
          %230 = sbr.rel (%p228) target = $region28
        $region27: #{tpu_custom_call.1} parent=19 // pred_region
          %s231 = sand.u32 %s109, 1
          %s232 = scalar_lea.sflag [#allocation3], %s231
          %s233 = sand.u32 %s109, 1
          %s234 = smul.addr %s233, 16
          %s235 = scalar_lea.vmem [#allocation2], %s234
          %s236 = smul.u32 2, %s29
          %s238 = ssub.s32 256, 256
          %239 = vsyncadd %s232, %s238
          %s240 = smul.addr %s28, 2
          %s241 = sadd.s32 %s236, %s240
          %s242 = smul.addr %s27, 2
          %s243 = sadd.s32 %s241, %s242
          %s244 = smul.addr %s243, 128
          %s245 = scalar_lea.hbm %s2, %s244
          %s247 = sshll.u32 %s235, 4
          %s248 = int_to_ptr.vmem [resolvable:$true] %s247
          %250 = dma.hbm_to_vmem [thread:$0]  %s245, 256, %s248, %s232
        $region28: #{tpu_custom_call.1} parent=19 // pred_fallthru
          _
      $region20: #{tpu_custom_call.1} parent=5 // pred_fallthru
        _
      %p251 = scmp.le.s32.totalorder 1, %s20
      %p252 = scmp.lt.s32.totalorder %s20, 3
      %p253 = pnand %p251, %p252
      %p254 = pneg %p253
      // Predicated region
      $region29: #{tpu_custom_call.1} parent=5 // pred_check
        _
      $region30: #{tpu_custom_call.1} parent=5 // pred_check_branch
        %256 = sbr.rel (%p253) target = $region32
      $region31: #{tpu_custom_call.1} parent=5 // pred_region
        %s257 = ssub.s32 %s20, 1
        %s258 = sand.u32 %s112, 1
        %s259 = scalar_lea.sflag [#allocation3], %s258
        %s260 = sand.u32 %s112, 1
        %s261 = smul.addr %s260, 16
        %s262 = scalar_lea.vmem [#allocation2], %s261
        // Predicated region
        $region33: #{tpu_custom_call.1} parent=31 // pred_check
          %p263 = pneg %p125
        $region34: #{tpu_custom_call.1} parent=31 // pred_check_branch
          %265 = sbr.rel (%p263) target = $region36
        $region35: #{tpu_custom_call.1} parent=31 // pred_region
          %266 = dma.done %s259, 256
        $region36: #{tpu_custom_call.1} parent=31 // pred_fallthru
          _
        %p267 = scmp.lt.s32.totalorder %s31, 0
        %s268 = scalar_select %p267, %s31, 0
        %s269 = smul.addr %s268, 8
        %s270 = scalar_lea.vmem %s0, %s269
        %p271 = pneg %p65
        %p272 = pneg %p62
        %s273 = smul.u32 2, %s32
        %p274 = scmp.lt.s32.totalorder %s30, 1
        %s275 = scalar_select %p274, %s30, 1
        %p276 = scmp.lt.s32.totalorder %s31, 0
        %s277 = scalar_select %p276, %s31, 0
        %p278 = scmp.lt.s32.totalorder %s273, 1
        %s279 = scalar_select %p278, %s273, 1
        %s280 = smul.addr %s277, 2
        %s281 = sadd.s32 %s279, %s280
        %s282 = smul.addr %s275, 2
        %s283 = sadd.s32 %s281, %s282
        %s284 = smul.addr %s283, 8
        %s285 = scalar_lea.vmem %s1, %s284
        %p286 = pneg %p95
        %p287 = pneg %p92
        %s288 = sand.u32 %s112, 1
        %s289 = scalar_lea.sflag [#allocation3], %s288
        %s290 = sand.u32 %s112, 1
        %s291 = smul.addr %s290, 16
        %s292 = scalar_lea.vmem [#allocation2], %s291
        %p293 = pneg %p125
        %p294 = pneg %p122
        %p295 = pneg %p155
        %p296 = pneg %p152
        %s297 = sand.u32 %s142, 1
        %s298 = scalar_lea.sflag [#allocation4], %s297
        %s299 = sand.u32 %s142, 1
        %s300 = smul.addr %s299, 16
        %s301 = scalar_lea.vmem [#allocation5], %s300
        %p302 = pneg %p185
        %p303 = pneg %p182
        %s304 = sand.u32 %s172, 1
        %s305 = scalar_lea.sflag [#allocation7], %s304
        %s306 = sand.u32 %s172, 1
        %s307 = smul.addr %s306, 16
        %s308 = scalar_lea.vmem [#allocation6], %s307
        %p309 = scmp.lt.s32.totalorder %s31, 0
        %s310 = scalar_select %p309, %s31, 0
        %s311 = smul.addr %s310, 8
        %s312 = scalar_lea.vmem %s0, %s311
        %s313 = smul.u32 2, %s32
        %p314 = scmp.lt.s32.totalorder %s30, 1
        %s315 = scalar_select %p314, %s30, 1
        %p316 = scmp.lt.s32.totalorder %s31, 0
        %s317 = scalar_select %p316, %s31, 0
        %p318 = scmp.lt.s32.totalorder %s313, 1
        %s319 = scalar_select %p318, %s313, 1
        %s320 = smul.addr %s317, 2
        %s321 = sadd.s32 %s319, %s320
        %s322 = smul.addr %s315, 2
        %s323 = sadd.s32 %s321, %s322
        %s324 = smul.addr %s323, 8
        %s325 = scalar_lea.vmem %s1, %s324
        %s326 = smul.u32 2, %s32
        %s327 = smul.u32 2, %s32
        %s328 = smul.u32 2, %s32
        %s329 = smul.u32 2, %s32
        %v330 = vld [vmem:[%s325] sm:$0xff]
        %v331 = vld [vmem:[%s325 + $0x8] sm:$0xff]
        %v332 = vld [vmem:[%s262] sm:$0xff]
        %v333 = vld [vmem:[%s262 + $0x8] sm:$0xff]
        %v334 = vld [vmem:[%s312] sm:$0xff]
        %336 = vset.pattern.permute.xlu0 0
        %337 = vperm.xlu0 %336, %v334
        %v338 = vpop.permute.xlu0 %337
        %v340 = vmul.f32 %v338, %v330
        %v341 = vmul.f32 %v338, %v331
        %s342 = scalar_lea.vmem %s312, 8
        %v343 = vld [vmem:[%s342] sm:$0xff]
        %345 = vset.pattern.permute.xlu0 0
        %346 = vperm.xlu0 %345, %v343
        %v347 = vpop.permute.xlu0 %346
        %v349 = vmul.f32 %v347, %v332
        %v350 = vmul.f32 %v347, %v333
        %v351 = vadd.f32 %v340, %v349
        %v352 = vadd.f32 %v341, %v350
        %353 = vst [vmem:[%s301] sm:$0xff] %v351
        %354 = vst [vmem:[%s301 + $0x8] sm:$0xff] %v352
        %s355 = scalar_lea.vmem %s312, 16
        %v356 = vld [vmem:[%s355] sm:$0xff]
        %358 = vset.pattern.permute.xlu0 0
        %359 = vperm.xlu0 %358, %v356
        %v360 = vpop.permute.xlu0 %359
        %v362 = vmul.f32 %v360, %v330
        %v363 = vmul.f32 %v360, %v331
        %s364 = scalar_lea.vmem %s312, 24
        %v365 = vld [vmem:[%s364] sm:$0xff]
        %367 = vset.pattern.permute.xlu0 0
        %368 = vperm.xlu0 %367, %v365
        %v369 = vpop.permute.xlu0 %368
        %v371 = vmul.f32 %v369, %v332
        %v372 = vmul.f32 %v369, %v333
        %v373 = vadd.f32 %v362, %v371
        %v374 = vadd.f32 %v363, %v372
        %375 = vst [vmem:[%s308] sm:$0xff] %v373
        %376 = vst [vmem:[%s308 + $0x8] sm:$0xff] %v374
        %s377 = sand.u32 %s142, 1
        %s378 = scalar_lea.sflag [#allocation4], %s377
        %s379 = sand.u32 %s142, 1
        %s380 = smul.addr %s379, 16
        %s381 = scalar_lea.vmem [#allocation5], %s380
        %s382 = sand.u32 %s172, 1
        %s383 = scalar_lea.sflag [#allocation7], %s382
        %s384 = sand.u32 %s172, 1
        %s385 = smul.addr %s384, 16
        %s386 = scalar_lea.vmem [#allocation6], %s385
        // Predicated region
        $region37: #{tpu_custom_call.1} parent=31 // pred_check
          %p387 = pneg %p152
        $region38: #{tpu_custom_call.1} parent=31 // pred_check_branch
          %389 = sbr.rel (%p387) target = $region40
        $region39: #{tpu_custom_call.1} parent=31 // pred_region
          %s390 = smul.u32 2, %s32
          %s392 = ssub.s32 256, 256
          %393 = vsyncadd %s378, %s392
          %s394 = smul.addr %s31, 2
          %s395 = sadd.s32 %s390, %s394
          %s396 = smul.addr %s30, 2
          %s397 = sadd.s32 %s395, %s396
          %s398 = smul.addr %s397, 128
          %s399 = scalar_lea.hbm %s3, %s398
          %s401 = sshll.u32 %s381, 4
          %s402 = int_to_ptr.vmem [resolvable:$true] %s401
          %404 = dma.vmem_to_hbm [thread:$0]  %s402, 256, %s399, %s378
        $region40: #{tpu_custom_call.1} parent=31 // pred_fallthru
          _
        // Predicated region
        $region41: #{tpu_custom_call.1} parent=31 // pred_check
          %p405 = pneg %p182
        $region42: #{tpu_custom_call.1} parent=31 // pred_check_branch
          %407 = sbr.rel (%p405) target = $region44
        $region43: #{tpu_custom_call.1} parent=31 // pred_region
          %s408 = smul.u32 2, %s32
          %s410 = ssub.s32 256, 256
          %411 = vsyncadd %s383, %s410
          %s412 = smul.addr %s31, 2
          %s413 = sadd.s32 %s408, %s412
          %s414 = smul.addr %s30, 2
          %s415 = sadd.s32 %s413, %s414
          %s416 = smul.addr %s415, 128
          %s417 = scalar_lea.hbm %s4, %s416
          %s419 = sshll.u32 %s386, 4
          %s420 = int_to_ptr.vmem [resolvable:$true] %s419
          %422 = dma.vmem_to_hbm [thread:$0]  %s420, 256, %s417, %s383
        $region44: #{tpu_custom_call.1} parent=31 // pred_fallthru
          _
      $region32: #{tpu_custom_call.1} parent=5 // pred_fallthru
        _
      %p423 = scmp.le.s32.totalorder 2, %s20
      // Predicated region
      $region45: #{tpu_custom_call.1} parent=5 // pred_check
        %p424 = pneg %p423
      $region46: #{tpu_custom_call.1} parent=5 // pred_check_branch
        %426 = sbr.rel (%p424) target = $region48
      $region47: #{tpu_custom_call.1} parent=5 // pred_region
        %s427 = ssub.s32 %s20, 2
        // Predicated region
        $region49: #{tpu_custom_call.1} parent=47 // pred_check
          %p428 = pneg %p158
        $region50: #{tpu_custom_call.1} parent=47 // pred_check_branch
          %430 = sbr.rel (%p428) target = $region52
        $region51: #{tpu_custom_call.1} parent=47 // pred_region
          %s431 = sand.u32 %s143, 1
          %s432 = scalar_lea.sflag [#allocation4], %s431
          %s433 = sand.u32 %s143, 1
          %s434 = smul.addr %s433, 16
          %s435 = scalar_lea.vmem [#allocation5], %s434
          %436 = dma.done %s432, 256
        $region52: #{tpu_custom_call.1} parent=47 // pred_fallthru
          _
        // Predicated region
        $region53: #{tpu_custom_call.1} parent=47 // pred_check
          %p437 = pneg %p188
        $region54: #{tpu_custom_call.1} parent=47 // pred_check_branch
          %439 = sbr.rel (%p437) target = $region56
        $region55: #{tpu_custom_call.1} parent=47 // pred_region
          %s440 = sand.u32 %s173, 1
          %s441 = scalar_lea.sflag [#allocation7], %s440
          %s442 = sand.u32 %s173, 1
          %s443 = smul.addr %s442, 16
          %s444 = scalar_lea.vmem [#allocation6], %s443
          %445 = dma.done %s441, 256
        $region56: #{tpu_custom_call.1} parent=47 // pred_fallthru
          _
      $region48: #{tpu_custom_call.1} parent=5 // pred_fallthru
        _
    $region6: #{tpu_custom_call.1} parent=1 // loop_footer
      %s24 = sadd.s32 1, %s20
    $region7: #{tpu_custom_call.1} parent=1 // loop_footer_branch
      %19 = sbr.rel target = $region3
    $region8: #{tpu_custom_call.1} parent=1 // loop_exit
      _
    %446 = vsyncpa [#allocation3], 1
    %s447 = scalar_lea.sflag [#allocation3], 1
    %448 = vsyncpa %s447, 1
    %449 = vsyncpa [#allocation4], 1
    %s450 = scalar_lea.sflag [#allocation4], 1
    %451 = vsyncpa %s450, 1
    %452 = vsyncpa [#allocation7], 1
    %s453 = scalar_lea.sflag [#allocation7], 1
    %454 = vsyncpa %s453, 1

</llo_original>
